<compile_context>
chip_gen: v7x
topology: tpu7x:2x2x1
jax: 0.10.0
libtpu: 0.0.40
codegen_flags: <defaults>
</compile_context>

<pallas_src>
import jax
import jax.numpy as jnp
import numpy as np
from jax.experimental import pallas as pl
from jax.experimental.pallas import tpu as pltpu

INPUT_DIM = 4
SHORT_TERM_MEMORY_LENGTH = 3
FEAT = INPUT_DIM * SHORT_TERM_MEMORY_LENGTH  # 12
N_ACTIONS = 2
HIDDEN = 32
BN_EPS = 1e-5      # nn.BatchNorm1d default eps
OUT_PAD = 128      # lane-dense output width (real outputs live in lanes 0:2)

# Packed parameter slab layout: f32 (88, 128)
#   rows  0:12, cols 0:32   -> w1   (12, 32)        (fc1 weight, pre-transposed)
#   rows 16:48, cols 0:32   -> w2   (32, 32)        (fc2 weight, pre-transposed)
#   rows 48:80, cols 0:128  -> w3   (32, 2) zero-padded to 128 output lanes
#   row  80,    cols 0:32   -> bn1 gamma
#   row  81,    cols 0:32   -> bn1 beta
#   row  82,    cols 0:32   -> bn2 gamma
#   row  83,    cols 0:32   -> bn2 beta
#   row  84,    cols 0:128  -> fc3 bias, zero-padded to 128 lanes
SLAB_ROWS = 88


def _bn_relu(h, gamma, beta):
    """Training-mode BatchNorm1d fused into scale/shift, followed by relu."""
    mu = jnp.mean(h, axis=0, keepdims=True)
    var = jnp.mean((h - mu) * (h - mu), axis=0, keepdims=True)   # biased variance
    scale = gamma * jax.lax.rsqrt(var + BN_EPS)                  # rsqrt -> EUP slot
    shift = beta - mu * scale
    return jnp.maximum(h * scale + shift, 0.0)


def mlp_kernel(x_ref, p_ref, o_ref):
    x = x_ref[...]                          # (B, 12)

    w1 = p_ref[0:12, 0:HIDDEN]              # (12, 32)
    w2 = p_ref[16:48, 0:HIDDEN]             # (32, 32)
    w3 = p_ref[48:80, :]                    # (32, 128)  cols >= 2 are zero
    g1 = p_ref[80:81, 0:HIDDEN]             # (1, 32)
    be1 = p_ref[81:82, 0:HIDDEN]
    g2 = p_ref[82:83, 0:HIDDEN]
    be2 = p_ref[83:84, 0:HIDDEN]
    b3 = p_ref[84:85, :]                    # (1, 128)

    # fc1 (bias dropped: cancelled by BN mean subtraction) + bn1 + relu
    h = jnp.dot(x, w1, preferred_element_type=jnp.float32)
    h = _bn_relu(h, g1, be1)

    # fc2 (bias dropped) + bn2 + relu
    h = jnp.dot(h, w2, preferred_element_type=jnp.float32)
    h = _bn_relu(h, g2, be2)

    # fc3 + elementwise square; lane-dense (B, 128) store
    y = jnp.dot(h, w3, preferred_element_type=jnp.float32) + b3
    o_ref[...] = y * y


def model_forward(x, slab):
    """x: (B, STM, INPUT_DIM) float32, slab: packed params -> (B, N_ACTIONS)."""
    b = x.shape[0]
    x2d = x.reshape(b, FEAT)  # mirrors torch x.reshape([-1, input_dim * stm])

    vmem = pl.BlockSpec(memory_space=pltpu.MemorySpace.VMEM)
    out = pl.pallas_call(
        mlp_kernel,
        out_shape=jax.ShapeDtypeStruct((b, OUT_PAD), jnp.float32),
        in_specs=[vmem, vmem],
        out_specs=vmem,
    )(x2d, slab)
    return out[:, :N_ACTIONS]


def init_params(key):
    """Deterministic init mimicking PyTorch Linear/BatchNorm1d defaults."""
    ks = jax.random.split(key, 6)

    def linear(kw, kb, fan_in, fan_out):
        bound = 1.0 / np.sqrt(fan_in)
        w = jax.random.uniform(kw, (fan_in, fan_out), jnp.float32, -bound, bound)
        b = jax.random.uniform(kb, (1, fan_out), jnp.float32, -bound, bound)
        return w, b

    w1, b1 = linear(ks[0], ks[1], FEAT, HIDDEN)
    w2, b2 = linear(ks[2], ks[3], HIDDEN, HIDDEN)
    w3, b3 = linear(ks[4], ks[5], HIDDEN, N_ACTIONS)
    return {
        "w1": w1, "b1": b1,
        "g1": jnp.ones((1, HIDDEN), jnp.float32), "be1": jnp.zeros((1, HIDDEN), jnp.float32),
        "w2": w2, "b2": b2,
        "g2": jnp.ones((1, HIDDEN), jnp.float32), "be2": jnp.zeros((1, HIDDEN), jnp.float32),
        "w3": w3, "b3": b3,
    }


def pack_params(p):
    """Pack all parameters into one (88, 128) slab -> single input DMA.

    fc1/fc2 biases are intentionally omitted: in training-mode BN they are
    cancelled by the batch-mean subtraction, so they never affect the output.
    """
    slab = jnp.zeros((SLAB_ROWS, OUT_PAD), jnp.float32)
    slab = slab.at[0:12, 0:HIDDEN].set(p["w1"])
    slab = slab.at[16:48, 0:HIDDEN].set(p["w2"])
    slab = slab.at[48:80, 0:N_ACTIONS].set(p["w3"])
    slab = slab.at[80, 0:HIDDEN].set(p["g1"].reshape(-1))
    slab = slab.at[81, 0:HIDDEN].set(p["be1"].reshape(-1))
    slab = slab.at[82, 0:HIDDEN].set(p["g2"].reshape(-1))
    slab = slab.at[83, 0:HIDDEN].set(p["be2"].reshape(-1))
    slab = slab.at[84, 0:N_ACTIONS].set(p["b3"].reshape(-1))
    return slab


def reference_forward(x, p):
    """Pure-JAX reference of the torch forward (keeps the fc1/fc2 biases)."""
    def bn(h, g, be):
        mu = jnp.mean(h, axis=0, keepdims=True)
        var = jnp.mean((h - mu) * (h - mu), axis=0, keepdims=True)
        return (h - mu) * jax.lax.rsqrt(var + BN_EPS) * g + be

    b = x.shape[0]
    h = x.reshape(b, -1) @ p["w1"] + p["b1"]
    h = jnp.maximum(bn(h, p["g1"], p["be1"]), 0.0)
    h = h @ p["w2"] + p["b2"]
    h = jnp.maximum(bn(h, p["g2"], p["be2"]), 0.0)
    y = h @ p["w3"] + p["b3"]
    return y * y


if __name__ == "__main__":
    key = jax.random.PRNGKey(0)
    kx, kp = jax.random.split(key)

    batch = 32
    x = jax.random.normal(kx, (batch, SHORT_TERM_MEMORY_LENGTH, INPUT_DIM), jnp.float32)
    params = init_params(kp)
    slab = pack_params(params)

    out = model_forward(x, slab)
    out = jax.block_until_ready(out)

    ref = reference_forward(x, params)
    np.testing.assert_allclose(np.asarray(out), np.asarray(ref), rtol=1e-4, atol=1e-5)

    print("KERNEL_OK")
</pallas_src>

<mosaic_0001>
module attributes {stable_mosaic.version = 11 : i64} {
  func.func @mlp_kernel(%arg0: memref<32x12xf32, #tpu.memory_space<vmem>>, %arg1: memref<88x128xf32, #tpu.memory_space<vmem>>, %arg2: memref<32x128xf32, #tpu.memory_space<vmem>>) attributes {dimension_semantics = [], scalar_prefetch = 0 : i64, scratch_operands = 0 : i64, tpu.core_type = #tpu.core_type<tc>} {
    %c0 = arith.constant 0 : index
    %c0_0 = arith.constant 0 : index
    %0 = vector.load %arg0[%c0, %c0_0] : memref<32x12xf32, #tpu.memory_space<vmem>>, vector<32x12xf32>
    %c0_1 = arith.constant 0 : index
    %c0_2 = arith.constant 0 : index
    %1 = vector.load %arg1[%c0_1, %c0_2] : memref<88x128xf32, #tpu.memory_space<vmem>>, vector<12x32xf32>
    %c16 = arith.constant 16 : index
    %c0_3 = arith.constant 0 : index
    %2 = vector.load %arg1[%c16, %c0_3] : memref<88x128xf32, #tpu.memory_space<vmem>>, vector<32x32xf32>
    %c48 = arith.constant 48 : index
    %c0_4 = arith.constant 0 : index
    %3 = vector.load %arg1[%c48, %c0_4] : memref<88x128xf32, #tpu.memory_space<vmem>>, vector<32x128xf32>
    %c80 = arith.constant 80 : index
    %c0_5 = arith.constant 0 : index
    %4 = vector.load %arg1[%c80, %c0_5] : memref<88x128xf32, #tpu.memory_space<vmem>>, vector<1x32xf32>
    %c81 = arith.constant 81 : index
    %c0_6 = arith.constant 0 : index
    %5 = vector.load %arg1[%c81, %c0_6] : memref<88x128xf32, #tpu.memory_space<vmem>>, vector<1x32xf32>
    %c82 = arith.constant 82 : index
    %c0_7 = arith.constant 0 : index
    %6 = vector.load %arg1[%c82, %c0_7] : memref<88x128xf32, #tpu.memory_space<vmem>>, vector<1x32xf32>
    %c83 = arith.constant 83 : index
    %c0_8 = arith.constant 0 : index
    %7 = vector.load %arg1[%c83, %c0_8] : memref<88x128xf32, #tpu.memory_space<vmem>>, vector<1x32xf32>
    %c84 = arith.constant 84 : index
    %c0_9 = arith.constant 0 : index
    %8 = vector.load %arg1[%c84, %c0_9] : memref<88x128xf32, #tpu.memory_space<vmem>>, vector<1x128xf32>
    %cst = arith.constant dense<0.000000e+00> : vector<32x32xf32>
    %9 = tpu.matmul %0, %1, %cst {dimension_numbers = #tpu.dot_dimension_numbers<[1], [0], [0], [1], [0, 0, 1, 1], [], []>} : vector<32x12xf32>, vector<12x32xf32>, vector<32x32xf32> -> vector<32x32xf32>
    %cst_10 = arith.constant dense<0.000000e+00> : vector<32xf32>
    %10 = vector.multi_reduction <add>, %9, %cst_10 [0] : vector<32x32xf32> to vector<32xf32>
    %11 = vector.shape_cast %10 : vector<32xf32> to vector<1x32xf32>
    %cst_11 = arith.constant 3.200000e+01 : f32
    %12 = vector.broadcast %cst_11 : f32 to vector<1x32xf32>
    %13 = arith.divf %11, %12 : vector<1x32xf32>
    %14 = vector.broadcast %13 : vector<1x32xf32> to vector<32x32xf32>
    %15 = arith.subf %9, %14 : vector<32x32xf32>
    %16 = vector.broadcast %13 : vector<1x32xf32> to vector<32x32xf32>
    %17 = arith.subf %9, %16 : vector<32x32xf32>
    %18 = arith.mulf %15, %17 : vector<32x32xf32>
    %cst_12 = arith.constant dense<0.000000e+00> : vector<32xf32>
    %19 = vector.multi_reduction <add>, %18, %cst_12 [0] : vector<32x32xf32> to vector<32xf32>
    %20 = vector.shape_cast %19 : vector<32xf32> to vector<1x32xf32>
    %cst_13 = arith.constant 3.200000e+01 : f32
    %21 = vector.broadcast %cst_13 : f32 to vector<1x32xf32>
    %22 = arith.divf %20, %21 : vector<1x32xf32>
    %cst_14 = arith.constant 9.99999974E-6 : f32
    %23 = vector.broadcast %cst_14 : f32 to vector<1x32xf32>
    %24 = arith.addf %22, %23 : vector<1x32xf32>
    %25 = math.rsqrt %24 : vector<1x32xf32>
    %26 = arith.mulf %4, %25 : vector<1x32xf32>
    %27 = arith.mulf %13, %26 : vector<1x32xf32>
    %28 = arith.subf %5, %27 : vector<1x32xf32>
    %29 = vector.broadcast %26 : vector<1x32xf32> to vector<32x32xf32>
    %30 = arith.mulf %9, %29 : vector<32x32xf32>
    %31 = vector.broadcast %28 : vector<1x32xf32> to vector<32x32xf32>
    %32 = arith.addf %30, %31 : vector<32x32xf32>
    %cst_15 = arith.constant 0.000000e+00 : f32
    %33 = vector.broadcast %cst_15 : f32 to vector<32x32xf32>
    %34 = arith.maximumf %32, %33 : vector<32x32xf32>
    %cst_16 = arith.constant dense<0.000000e+00> : vector<32x32xf32>
    %35 = tpu.matmul %34, %2, %cst_16 {dimension_numbers = #tpu.dot_dimension_numbers<[1], [0], [0], [1], [0, 0, 1, 1], [], []>} : vector<32x32xf32>, vector<32x32xf32>, vector<32x32xf32> -> vector<32x32xf32>
    %cst_17 = arith.constant dense<0.000000e+00> : vector<32xf32>
    %36 = vector.multi_reduction <add>, %35, %cst_17 [0] : vector<32x32xf32> to vector<32xf32>
    %37 = vector.shape_cast %36 : vector<32xf32> to vector<1x32xf32>
    %cst_18 = arith.constant 3.200000e+01 : f32
    %38 = vector.broadcast %cst_18 : f32 to vector<1x32xf32>
    %39 = arith.divf %37, %38 : vector<1x32xf32>
    %40 = vector.broadcast %39 : vector<1x32xf32> to vector<32x32xf32>
    %41 = arith.subf %35, %40 : vector<32x32xf32>
    %42 = vector.broadcast %39 : vector<1x32xf32> to vector<32x32xf32>
    %43 = arith.subf %35, %42 : vector<32x32xf32>
    %44 = arith.mulf %41, %43 : vector<32x32xf32>
    %cst_19 = arith.constant dense<0.000000e+00> : vector<32xf32>
    %45 = vector.multi_reduction <add>, %44, %cst_19 [0] : vector<32x32xf32> to vector<32xf32>
    %46 = vector.shape_cast %45 : vector<32xf32> to vector<1x32xf32>
    %cst_20 = arith.constant 3.200000e+01 : f32
    %47 = vector.broadcast %cst_20 : f32 to vector<1x32xf32>
    %48 = arith.divf %46, %47 : vector<1x32xf32>
    %cst_21 = arith.constant 9.99999974E-6 : f32
    %49 = vector.broadcast %cst_21 : f32 to vector<1x32xf32>
    %50 = arith.addf %48, %49 : vector<1x32xf32>
    %51 = math.rsqrt %50 : vector<1x32xf32>
    %52 = arith.mulf %6, %51 : vector<1x32xf32>
    %53 = arith.mulf %39, %52 : vector<1x32xf32>
    %54 = arith.subf %7, %53 : vector<1x32xf32>
    %55 = vector.broadcast %52 : vector<1x32xf32> to vector<32x32xf32>
    %56 = arith.mulf %35, %55 : vector<32x32xf32>
    %57 = vector.broadcast %54 : vector<1x32xf32> to vector<32x32xf32>
    %58 = arith.addf %56, %57 : vector<32x32xf32>
    %cst_22 = arith.constant 0.000000e+00 : f32
    %59 = vector.broadcast %cst_22 : f32 to vector<32x32xf32>
    %60 = arith.maximumf %58, %59 : vector<32x32xf32>
    %cst_23 = arith.constant dense<0.000000e+00> : vector<32x128xf32>
    %61 = tpu.matmul %60, %3, %cst_23 {dimension_numbers = #tpu.dot_dimension_numbers<[1], [0], [0], [1], [0, 0, 1, 1], [], []>} : vector<32x32xf32>, vector<32x128xf32>, vector<32x128xf32> -> vector<32x128xf32>
    %62 = vector.broadcast %8 : vector<1x128xf32> to vector<32x128xf32>
    %63 = arith.addf %61, %62 : vector<32x128xf32>
    %64 = arith.mulf %63, %63 : vector<32x128xf32>
    %c0_24 = arith.constant 0 : index
    %c0_25 = arith.constant 0 : index
    %65 = vector.load %arg2[%c0_24, %c0_25] : memref<32x128xf32, #tpu.memory_space<vmem>>, vector<32x128xf32>
    tpu.vector_store %arg2[%c0_24, %c0_25], %64 {strides = array<i32>} : memref<32x128xf32, #tpu.memory_space<vmem>>, vector<32x128xf32>,
    return
  }
}

</mosaic_0001>

<llo_original>
// kernel: tpu_custom_call.1
$region0: #{tpu_custom_call.1}
  #allocation0 [shape = 'u32[]', space=smem, size = 0x4, offset = 0x4, fixed_abs, tag = 'smem constant byte address 0x4 - core index']
  #allocation1 [shape = 'u32[144,128]{1,0:T(1,128)}', space=vmem, size = 0x12000, scoped, tag = 'internal scratch']
  %s0 = inlined_call_operand.vmem [shape: f32[32,12], index: 0, kind: input, shape index: {}]
  %s1 = inlined_call_operand.hbm [shape: f32[88,128], index: 1, kind: input, shape index: {}]
  %s2 = inlined_call_operand.hbm [shape: f32[32,128], index: 2, kind: output, shape index: {}]
  %s3 = sld [smem:[#allocation0]]
  $region22: #{tpu_custom_call.1} parent=0
    _
  %s5 = ssub.s32 1, %s3
  %s6 = scalar_select 0, %s5, %s3
  $region1: #{tpu_custom_call.1} parent=0
    #allocation2 [shape = 'u8[45056]{0}', space=vmem, size = 0xb000, scoped, tag = 'input window, operand 1, single buffered']
    #allocation3 [shape = 's32[1]{0}', space=sflag, size = 0x4, scoped, tag = 'scoped memory for tpu_custom_call.1']
    #allocation4 [shape = 's32[1]{0}', space=sflag, size = 0x4, scoped, tag = 'scoped memory for tpu_custom_call.1']
    #allocation5 [shape = 'u8[16384]{0}', space=vmem, size = 0x4000, scoped, tag = 'output window, operand 0, single buffered']
    %7 = vsyncpa [#allocation3], 0
    %8 = vsyncpa [#allocation4], 0
    // Predicated region
    $region2: #{tpu_custom_call.1} parent=1 // pred_check
      _
    $region3: #{tpu_custom_call.1} parent=1 // pred_check_branch
      %10 = sbr.rel (0) target = $region5
    $region4: #{tpu_custom_call.1} parent=1 // pred_region
      _
    $region5: #{tpu_custom_call.1} parent=1 // pred_fallthru
      _
    // Predicated region
    $region6: #{tpu_custom_call.1} parent=1 // pred_check
      _
    $region7: #{tpu_custom_call.1} parent=1 // pred_check_branch
      %12 = sbr.rel (0) target = $region9
    $region8: #{tpu_custom_call.1} parent=1 // pred_region
      %s14 = ssub.s32 1408, 1408
      %15 = vsyncadd [#allocation3], %s14
      %s16 = sshll.u32 [#allocation2], 4
      %s17 = int_to_ptr.vmem [resolvable:$true] %s16
      %22 = dma.hbm_to_vmem [thread:$0]  %s1, 1408, %s17, [#allocation3], 128, 128, 8
    $region9: #{tpu_custom_call.1} parent=1 // pred_fallthru
      _
    // Predicated region
    $region10: #{tpu_custom_call.1} parent=1 // pred_check
      _
    $region11: #{tpu_custom_call.1} parent=1 // pred_check_branch
      %24 = sbr.rel (0) target = $region13
    $region12: #{tpu_custom_call.1} parent=1 // pred_region
      %25 = dma.done [#allocation3], 1408
    $region13: #{tpu_custom_call.1} parent=1 // pred_fallthru
      _
    %v26 = vld [vmem:[%s0] sm:$0xff]
    %v27 = vld [vmem:[%s0 + $0x8] sm:$0xff]
    %v28 = vld [vmem:[%s0 + $0x10] sm:$0xff]
    %v29 = vld [vmem:[%s0 + $0x18] sm:$0xff]
    %v30 = vld [vmem:[#allocation2] sm:$0xff]
    %v31 = vld [vmem:[#allocation2 + $0x8] sm:$0xf]
    %v32 = vld [vmem:[#allocation2 + $0x10] sm:$0xff]
    %v33 = vld [vmem:[#allocation2 + $0x18] sm:$0xff]
    %v34 = vld [vmem:[#allocation2 + $0x20] sm:$0xff]
    %v35 = vld [vmem:[#allocation2 + $0x28] sm:$0xff]
    %v36 = vld [vmem:[#allocation2 + $0x30] sm:$0xff]
    %v37 = vld [vmem:[#allocation2 + $0x38] sm:$0xff]
    %v38 = vld [vmem:[#allocation2 + $0x40] sm:$0xff]
    %v39 = vld [vmem:[#allocation2 + $0x48] sm:$0xff]
    %v40 = vld [vmem:[#allocation2 + $0x50] sm:$0x1]
    %v41 = vld [vmem:[#allocation2 + $0x51] sm:$0x1]
    %v42 = vld [vmem:[#allocation2 + $0x52] sm:$0x1]
    %v43 = vld [vmem:[#allocation2 + $0x53] sm:$0x1]
    %v44 = vld [vmem:[#allocation2 + $0x54] sm:$0x1]
    %vm45 = vcmask 97280
    %v47 = vsel %vm45, %v26, 0
    %v50 = vsel %vm45, %v27, 0
    %v53 = vsel %vm45, %v28, 0
    %v56 = vsel %vm45, %v29, 0
    %vm58 = vcmask 1043456
    %v60 = vsel %vm58, %v31, 0
    %62 = vmatprep.subr.mxu0 0.0
    %63 = vmatpush1.msra.mxu0 %v30
    %64 = vmatprep.subr.mxu0 0.0
    %65 = vmatpush1.msra.mxu0 %v60
    %66 = vmatprep.subr.mxu0 0.0
    %67 = vmatpush1.msra.mxu0 0.0
    %68 = vmatprep.subr.mxu0 0.0
    %69 = vmatpush1.msra.mxu0 0.0
    %70 = vmatprep.subr.mxu0 0.0
    %71 = vmatpush1.msra.mxu0 0.0
    %72 = vmatprep.subr.mxu0 0.0
    %73 = vmatpush1.msra.mxu0 0.0
    %74 = vmatprep.subr.mxu0 0.0
    %75 = vmatpush1.msra.mxu0 0.0
    %76 = vmatprep.subr.mxu0 0.0
    %77 = vmatpush1.msra.mxu0 0.0
    %78 = vmatprep.subr.mxu0 0.0
    %79 = vmatpush1.msra.mxu0 0.0
    %80 = vmatprep.subr.mxu0 0.0
    %81 = vmatpush1.msra.mxu0 0.0
    %82 = vmatprep.subr.mxu0 0.0
    %83 = vmatpush1.msra.mxu0 0.0
    %84 = vmatprep.subr.mxu0 0.0
    %85 = vmatpush1.msra.mxu0 0.0
    %86 = vmatprep.subr.mxu0 0.0
    %87 = vmatpush1.msra.mxu0 0.0
    %88 = vmatprep.subr.mxu0 0.0
    %89 = vmatpush1.msra.mxu0 0.0
    %90 = vmatprep.subr.mxu0 0.0
    %91 = vmatpush1.msra.mxu0 0.0
    %92 = vmatprep.subr.mxu0 0.0
    %93 = vmatpush1.msra.mxu0 0.0
    %94 = vmatprep.subr.mxu0 0.0
    %95 = vmatpush1.msra.mxu0 0.0
    %96 = vmatprep.subr.mxu0 0.0
    %97 = vmatpush1.msra.mxu0 0.0
    %98 = vmatprep.subr.mxu0 0.0
    %99 = vmatpush1.msra.mxu0 0.0
    %100 = vmatprep.subr.mxu0 0.0
    %101 = vmatpush1.msra.mxu0 0.0
    %102 = vmatprep.subr.mxu0 0.0
    %103 = vmatpush1.msra.mxu0 0.0
    %104 = vmatprep.subr.mxu0 0.0
    %105 = vmatpush1.msra.mxu0 0.0
    %106 = vmatprep.subr.mxu0 0.0
    %107 = vmatpush1.msra.mxu0 0.0
    %108 = vmatprep.subr.mxu0 0.0
    %109 = vmatpush1.msra.mxu0 0.0
    %110 = vmatprep.subr.mxu0 0.0
    %111 = vmatpush1.msra.mxu0 0.0
    %112 = vmatprep.subr.mxu0 0.0
    %113 = vmatpush1.msra.mxu0 0.0
    %114 = vmatprep.subr.mxu0 0.0
    %115 = vmatpush1.msra.mxu0 0.0
    %116 = vmatprep.subr.mxu0 0.0
    %117 = vmatpush1.msra.mxu0 0.0
    %118 = vmatprep.subr.mxu0 0.0
    %119 = vmatpush1.msra.mxu0 0.0
    %120 = vmatprep.subr.mxu0 0.0
    %121 = vmatpush1.msra.mxu0 0.0
    %122 = vmatprep.subr.mxu0 0.0
    %123 = vmatpush1.msra.mxu0 0.0
    %124 = vmatprep.subr.mxu0 0.0
    %125 = vmatpush1.msra.mxu0 0.0
    %126 = vmatprep.mubr.f32.mxu0 0.0
    %127 = vmatmul.mubr.f32.gmra.mrb[0].mxu0 %v47
    %v128 = vpop.f32.mrb[0].mxu0
    %v129 = vadd.f32 0.0, %v128
    %v130 = vpop.f32.mrb[0].mxu0
    %131 = vmatprep.mubr.f32.mxu0 0.0
    %132 = vmatmul.mubr.f32.gmra.mrb[0].mxu0 %v50
    %v133 = vpop.f32.mrb[0].mxu0
    %v134 = vadd.f32 0.0, %v133
    %v135 = vpop.f32.mrb[0].mxu0
    %136 = vmatprep.mubr.f32.mxu0 0.0
    %137 = vmatmul.mubr.f32.gmra.mrb[0].mxu0 %v53
    %v138 = vpop.f32.mrb[0].mxu0
    %v139 = vadd.f32 0.0, %v138
    %v140 = vpop.f32.mrb[0].mxu0
    %141 = vmatprep.mubr.f32.mxu0 0.0
    %142 = vmatmul.mubr.f32.gmra.mrb[0].mxu0 %v56
    %v143 = vpop.f32.mrb[0].mxu0
    %v144 = vadd.f32 0.0, %v143
    %v145 = vpop.f32.mrb[0].mxu0
    %146 = vdwg.mxu0
    %vm147 = vcmask 261120
    %v148 = vsel %vm147, %v129, 0.0
    %v149 = vsel %vm147, %v134, 0.0
    %v150 = vadd.f32 %v148, %v149
    %v151 = vsel %vm147, %v139, 0.0
    %v152 = vadd.f32 %v150, %v151
    %v153 = vsel %vm147, %v144, 0.0
    %v154 = vadd.f32 %v152, %v153
    %v155 = vrot.slane %v154, 4
    %v156 = vadd.f32 %v154, %v155
    %v157 = vrot.slane %v156, 2
    %v158 = vadd.f32 %v156, %v157
    %v159 = vrot.slane %v158, 1
    %v160 = vadd.f32 %v158, %v159
    %v161 = vrcp.pop 32.0
    %v162 = vmul.f32 %v160, %v161
    %v163 = vsub.f32 %v129, %v162
    %v164 = vsub.f32 %v134, %v162
    %v165 = vsub.f32 %v139, %v162
    %v166 = vsub.f32 %v144, %v162
    %v167 = vmul.f32 %v163, %v163
    %v168 = vmul.f32 %v164, %v164
    %v169 = vmul.f32 %v165, %v165
    %v170 = vmul.f32 %v166, %v166
    %v171 = vsel %vm147, %v167, 0.0
    %v172 = vsel %vm147, %v168, 0.0
    %v173 = vadd.f32 %v171, %v172
    %v174 = vsel %vm147, %v169, 0.0
    %v175 = vadd.f32 %v173, %v174
    %v176 = vsel %vm147, %v170, 0.0
    %v177 = vadd.f32 %v175, %v176
    %v178 = vrot.slane %v177, 4
    %v179 = vadd.f32 %v177, %v178
    %v180 = vrot.slane %v179, 2
    %v181 = vadd.f32 %v179, %v180
    %v182 = vrot.slane %v181, 1
    %v183 = vadd.f32 %v181, %v182
    %v184 = vmul.f32 %v183, %v161
    %v185 = vadd.f32 %v184, 1e-05
    %v186 = vrsqrt.pop %v185
    %v187 = vmul.f32 %v40, %v186
    %v188 = vmul.f32 %v162, %v187
    %v189 = vsub.f32 %v41, %v188
    %v190 = vlaneseq
    %v191 = vshrl.u32 %v190, 7
    %v192 = vsub.s32 0, %v191
    %v193 = vrot.slane %v187, %v192
    %v194 = vmul.f32 %v129, %v193
    %v195 = vmul.f32 %v134, %v193
    %v196 = vmul.f32 %v139, %v193
    %v197 = vmul.f32 %v144, %v193
    %v198 = vlaneseq
    %v199 = vshrl.u32 %v198, 7
    %v200 = vsub.s32 0, %v199
    %v201 = vrot.slane %v189, %v200
    %v202 = vadd.f32 %v194, %v201
    %v203 = vadd.f32 %v195, %v201
    %v204 = vadd.f32 %v196, %v201
    %v205 = vadd.f32 %v197, %v201
    %v206 = vmax.f32 %v202, 0.0
    %v207 = vmax.f32 %v203, 0.0
    %v208 = vmax.f32 %v204, 0.0
    %v209 = vmax.f32 %v205, 0.0
    %v211 = vsel %vm147, %v206, 0
    %v214 = vsel %vm147, %v207, 0
    %v217 = vsel %vm147, %v208, 0
    %v220 = vsel %vm147, %v209, 0
    %222 = vmatprep.subr.mxu0 0.0
    %223 = vmatpush1.msra.mxu0 %v32
    %224 = vmatprep.subr.mxu0 0.0
    %225 = vmatpush1.msra.mxu0 %v33
    %226 = vmatprep.subr.mxu0 0.0
    %227 = vmatpush1.msra.mxu0 %v34
    %228 = vmatprep.subr.mxu0 0.0
    %229 = vmatpush1.msra.mxu0 %v35
    %230 = vmatprep.subr.mxu0 0.0
    %231 = vmatpush1.msra.mxu0 0.0
    %232 = vmatprep.subr.mxu0 0.0
    %233 = vmatpush1.msra.mxu0 0.0
    %234 = vmatprep.subr.mxu0 0.0
    %235 = vmatpush1.msra.mxu0 0.0
    %236 = vmatprep.subr.mxu0 0.0
    %237 = vmatpush1.msra.mxu0 0.0
    %238 = vmatprep.subr.mxu0 0.0
    %239 = vmatpush1.msra.mxu0 0.0
    %240 = vmatprep.subr.mxu0 0.0
    %241 = vmatpush1.msra.mxu0 0.0
    %242 = vmatprep.subr.mxu0 0.0
    %243 = vmatpush1.msra.mxu0 0.0
    %244 = vmatprep.subr.mxu0 0.0
    %245 = vmatpush1.msra.mxu0 0.0
    %246 = vmatprep.subr.mxu0 0.0
    %247 = vmatpush1.msra.mxu0 0.0
    %248 = vmatprep.subr.mxu0 0.0
    %249 = vmatpush1.msra.mxu0 0.0
    %250 = vmatprep.subr.mxu0 0.0
    %251 = vmatpush1.msra.mxu0 0.0
    %252 = vmatprep.subr.mxu0 0.0
    %253 = vmatpush1.msra.mxu0 0.0
    %254 = vmatprep.subr.mxu0 0.0
    %255 = vmatpush1.msra.mxu0 0.0
    %256 = vmatprep.subr.mxu0 0.0
    %257 = vmatpush1.msra.mxu0 0.0
    %258 = vmatprep.subr.mxu0 0.0
    %259 = vmatpush1.msra.mxu0 0.0
    %260 = vmatprep.subr.mxu0 0.0
    %261 = vmatpush1.msra.mxu0 0.0
    %262 = vmatprep.subr.mxu0 0.0
    %263 = vmatpush1.msra.mxu0 0.0
    %264 = vmatprep.subr.mxu0 0.0
    %265 = vmatpush1.msra.mxu0 0.0
    %266 = vmatprep.subr.mxu0 0.0
    %267 = vmatpush1.msra.mxu0 0.0
    %268 = vmatprep.subr.mxu0 0.0
    %269 = vmatpush1.msra.mxu0 0.0
    %270 = vmatprep.subr.mxu0 0.0
    %271 = vmatpush1.msra.mxu0 0.0
    %272 = vmatprep.subr.mxu0 0.0
    %273 = vmatpush1.msra.mxu0 0.0
    %274 = vmatprep.subr.mxu0 0.0
    %275 = vmatpush1.msra.mxu0 0.0
    %276 = vmatprep.subr.mxu0 0.0
    %277 = vmatpush1.msra.mxu0 0.0
    %278 = vmatprep.subr.mxu0 0.0
    %279 = vmatpush1.msra.mxu0 0.0
    %280 = vmatprep.subr.mxu0 0.0
    %281 = vmatpush1.msra.mxu0 0.0
    %282 = vmatprep.subr.mxu0 0.0
    %283 = vmatpush1.msra.mxu0 0.0
    %284 = vmatprep.subr.mxu0 0.0
    %285 = vmatpush1.msra.mxu0 0.0
    %286 = vmatprep.mubr.f32.mxu0 0.0
    %287 = vmatmul.mubr.f32.gmra.mrb[0].mxu0 %v211
    %v288 = vpop.f32.mrb[0].mxu0
    %v289 = vadd.f32 0.0, %v288
    %v290 = vpop.f32.mrb[0].mxu0
    %291 = vmatprep.mubr.f32.mxu0 0.0
    %292 = vmatmul.mubr.f32.gmra.mrb[0].mxu0 %v214
    %v293 = vpop.f32.mrb[0].mxu0
    %v294 = vadd.f32 0.0, %v293
    %v295 = vpop.f32.mrb[0].mxu0
    %296 = vmatprep.mubr.f32.mxu0 0.0
    %297 = vmatmul.mubr.f32.gmra.mrb[0].mxu0 %v217
    %v298 = vpop.f32.mrb[0].mxu0
    %v299 = vadd.f32 0.0, %v298
    %v300 = vpop.f32.mrb[0].mxu0
    %301 = vmatprep.mubr.f32.mxu0 0.0
    %302 = vmatmul.mubr.f32.gmra.mrb[0].mxu0 %v220
    %v303 = vpop.f32.mrb[0].mxu0
    %v304 = vadd.f32 0.0, %v303
    %v305 = vpop.f32.mrb[0].mxu0
    %306 = vdwg.mxu0
    %v307 = vsel %vm147, %v289, 0.0
    %v308 = vsel %vm147, %v294, 0.0
    %v309 = vadd.f32 %v307, %v308
    %v310 = vsel %vm147, %v299, 0.0
    %v311 = vadd.f32 %v309, %v310
    %v312 = vsel %vm147, %v304, 0.0
    %v313 = vadd.f32 %v311, %v312
    %v314 = vrot.slane %v313, 4
    %v315 = vadd.f32 %v313, %v314
    %v316 = vrot.slane %v315, 2
    %v317 = vadd.f32 %v315, %v316
    %v318 = vrot.slane %v317, 1
    %v319 = vadd.f32 %v317, %v318
    %v320 = vmul.f32 %v319, %v161
    %v321 = vsub.f32 %v289, %v320
    %v322 = vsub.f32 %v294, %v320
    %v323 = vsub.f32 %v299, %v320
    %v324 = vsub.f32 %v304, %v320
    %v325 = vmul.f32 %v321, %v321
    %v326 = vmul.f32 %v322, %v322
    %v327 = vmul.f32 %v323, %v323
    %v328 = vmul.f32 %v324, %v324
    %v329 = vsel %vm147, %v325, 0.0
    %v330 = vsel %vm147, %v326, 0.0
    %v331 = vadd.f32 %v329, %v330
    %v332 = vsel %vm147, %v327, 0.0
    %v333 = vadd.f32 %v331, %v332
    %v334 = vsel %vm147, %v328, 0.0
    %v335 = vadd.f32 %v333, %v334
    %v336 = vrot.slane %v335, 4
    %v337 = vadd.f32 %v335, %v336
    %v338 = vrot.slane %v337, 2
    %v339 = vadd.f32 %v337, %v338
    %v340 = vrot.slane %v339, 1
    %v341 = vadd.f32 %v339, %v340
    %v342 = vmul.f32 %v341, %v161
    %v343 = vadd.f32 %v342, 1e-05
    %v344 = vrsqrt.pop %v343
    %v345 = vmul.f32 %v42, %v344
    %v346 = vmul.f32 %v320, %v345
    %v347 = vsub.f32 %v43, %v346
    %v348 = vlaneseq
    %v349 = vshrl.u32 %v348, 7
    %v350 = vsub.s32 0, %v349
    %v351 = vrot.slane %v345, %v350
    %v352 = vmul.f32 %v289, %v351
    %v353 = vmul.f32 %v294, %v351
    %v354 = vmul.f32 %v299, %v351
    %v355 = vmul.f32 %v304, %v351
    %v356 = vlaneseq
    %v357 = vshrl.u32 %v356, 7
    %v358 = vsub.s32 0, %v357
    %v359 = vrot.slane %v347, %v358
    %v360 = vadd.f32 %v352, %v359
    %v361 = vadd.f32 %v353, %v359
    %v362 = vadd.f32 %v354, %v359
    %v363 = vadd.f32 %v355, %v359
    %v364 = vmax.f32 %v360, 0.0
    %v365 = vmax.f32 %v361, 0.0
    %v366 = vmax.f32 %v362, 0.0
    %v367 = vmax.f32 %v363, 0.0
    %v368 = vlaneseq
    %v369 = vshrl.u32 %v368, 7
    %v370 = vsub.s32 0, %v369
    %v371 = vrot.slane %v44, %v370
    %v373 = vsel %vm147, %v364, 0
    %v376 = vsel %vm147, %v365, 0
    %v379 = vsel %vm147, %v366, 0
    %v382 = vsel %vm147, %v367, 0
    %384 = vmatprep.subr.mxu0 0.0
    %385 = vmatpush1.msra.mxu0 %v36
    %386 = vmatprep.subr.mxu0 0.0
    %387 = vmatpush1.msra.mxu0 %v37
    %388 = vmatprep.subr.mxu0 0.0
    %389 = vmatpush1.msra.mxu0 %v38
    %390 = vmatprep.subr.mxu0 0.0
    %391 = vmatpush1.msra.mxu0 %v39
    %392 = vmatprep.subr.mxu0 0.0
    %393 = vmatpush1.msra.mxu0 0.0
    %394 = vmatprep.subr.mxu0 0.0
    %395 = vmatpush1.msra.mxu0 0.0
    %396 = vmatprep.subr.mxu0 0.0
    %397 = vmatpush1.msra.mxu0 0.0
    %398 = vmatprep.subr.mxu0 0.0
    %399 = vmatpush1.msra.mxu0 0.0
    %400 = vmatprep.subr.mxu0 0.0
    %401 = vmatpush1.msra.mxu0 0.0
    %402 = vmatprep.subr.mxu0 0.0
    %403 = vmatpush1.msra.mxu0 0.0
    %404 = vmatprep.subr.mxu0 0.0
    %405 = vmatpush1.msra.mxu0 0.0
    %406 = vmatprep.subr.mxu0 0.0
    %407 = vmatpush1.msra.mxu0 0.0
    %408 = vmatprep.subr.mxu0 0.0
    %409 = vmatpush1.msra.mxu0 0.0
    %410 = vmatprep.subr.mxu0 0.0
    %411 = vmatpush1.msra.mxu0 0.0
    %412 = vmatprep.subr.mxu0 0.0
    %413 = vmatpush1.msra.mxu0 0.0
    %414 = vmatprep.subr.mxu0 0.0
    %415 = vmatpush1.msra.mxu0 0.0
    %416 = vmatprep.subr.mxu0 0.0
    %417 = vmatpush1.msra.mxu0 0.0
    %418 = vmatprep.subr.mxu0 0.0
    %419 = vmatpush1.msra.mxu0 0.0
    %420 = vmatprep.subr.mxu0 0.0
    %421 = vmatpush1.msra.mxu0 0.0
    %422 = vmatprep.subr.mxu0 0.0
    %423 = vmatpush1.msra.mxu0 0.0
    %424 = vmatprep.subr.mxu0 0.0
    %425 = vmatpush1.msra.mxu0 0.0
    %426 = vmatprep.subr.mxu0 0.0
    %427 = vmatpush1.msra.mxu0 0.0
    %428 = vmatprep.subr.mxu0 0.0
    %429 = vmatpush1.msra.mxu0 0.0
    %430 = vmatprep.subr.mxu0 0.0
    %431 = vmatpush1.msra.mxu0 0.0
    %432 = vmatprep.subr.mxu0 0.0
    %433 = vmatpush1.msra.mxu0 0.0
    %434 = vmatprep.subr.mxu0 0.0
    %435 = vmatpush1.msra.mxu0 0.0
    %436 = vmatprep.subr.mxu0 0.0
    %437 = vmatpush1.msra.mxu0 0.0
    %438 = vmatprep.subr.mxu0 0.0
    %439 = vmatpush1.msra.mxu0 0.0
    %440 = vmatprep.subr.mxu0 0.0
    %441 = vmatpush1.msra.mxu0 0.0
    %442 = vmatprep.subr.mxu0 0.0
    %443 = vmatpush1.msra.mxu0 0.0
    %444 = vmatprep.subr.mxu0 0.0
    %445 = vmatpush1.msra.mxu0 0.0
    %446 = vmatprep.subr.mxu0 0.0
    %447 = vmatpush1.msra.mxu0 0.0
    %448 = vmatprep.mubr.f32.mxu0 0.0
    %449 = vmatmul.mubr.f32.gmra.mrb[0].mxu0 %v373
    %v450 = vpop.f32.mrb[0].mxu0
    %v451 = vadd.f32 %v371, %v450
    %v452 = vpop.f32.mrb[0].mxu0
    %453 = vmatprep.mubr.f32.mxu0 0.0
    %454 = vmatmul.mubr.f32.gmra.mrb[0].mxu0 %v376
    %v455 = vpop.f32.mrb[0].mxu0
    %v456 = vadd.f32 %v371, %v455
    %v457 = vpop.f32.mrb[0].mxu0
    %458 = vmatprep.mubr.f32.mxu0 0.0
    %459 = vmatmul.mubr.f32.gmra.mrb[0].mxu0 %v379
    %v460 = vpop.f32.mrb[0].mxu0
    %v461 = vadd.f32 %v371, %v460
    %v462 = vpop.f32.mrb[0].mxu0
    %463 = vmatprep.mubr.f32.mxu0 0.0
    %464 = vmatmul.mubr.f32.gmra.mrb[0].mxu0 %v382
    %v465 = vpop.f32.mrb[0].mxu0
    %v466 = vadd.f32 %v371, %v465
    %v467 = vpop.f32.mrb[0].mxu0
    %468 = vdwg.mxu0
    %v469 = vmul.f32 %v451, %v451
    %v470 = vmul.f32 %v456, %v456
    %v471 = vmul.f32 %v461, %v461
    %v472 = vmul.f32 %v466, %v466
    %473 = vst [vmem:[#allocation5] sm:$0xff] %v469
    %474 = vst [vmem:[#allocation5 + $0x8] sm:$0xff] %v470
    %475 = vst [vmem:[#allocation5 + $0x10] sm:$0xff] %v471
    %476 = vst [vmem:[#allocation5 + $0x18] sm:$0xff] %v472
    // Predicated region
    $region14: #{tpu_custom_call.1} parent=1 // pred_check
      _
    $region15: #{tpu_custom_call.1} parent=1 // pred_check_branch
      %478 = sbr.rel (0) target = $region17
    $region16: #{tpu_custom_call.1} parent=1 // pred_region
      %s480 = ssub.s32 512, 512
      %481 = vsyncadd [#allocation4], %s480
      %s482 = sshll.u32 [#allocation5], 4
      %s483 = int_to_ptr.vmem [resolvable:$true] %s482
      %488 = dma.vmem_to_hbm [thread:$0]  %s483, 512, %s2, [#allocation4], 128, 128, 8
    $region17: #{tpu_custom_call.1} parent=1 // pred_fallthru
      _
    // Predicated region
    $region18: #{tpu_custom_call.1} parent=1 // pred_check
      _
    $region19: #{tpu_custom_call.1} parent=1 // pred_check_branch
      %490 = sbr.rel (0) target = $region21
    $region20: #{tpu_custom_call.1} parent=1 // pred_region
      %491 = dma.done [#allocation4], 512
    $region21: #{tpu_custom_call.1} parent=1 // pred_fallthru
      _
    %492 = vsyncpa [#allocation3], 1
    %493 = vsyncpa [#allocation4], 1

</llo_original>
